<compile_context>
chip_gen: v5e
topology: v5e:2x2
jax: 0.10.0
libtpu: 0.0.40
codegen_flags: <defaults>
</compile_context>

<pallas_src>
import math

import jax
import jax.numpy as jnp
from jax.experimental import pallas as pl
from jax.experimental.pallas import tpu as pltpu

LEAKY_SLOPE = 0.01   # torch.nn.LeakyReLU default negative_slope
BN_EPS = 1e-5        # torch.nn.BatchNorm2d default eps

# bf16 MXU inputs; accumulation and epilogue remain f32.
MXU_INPUT_DTYPE = jnp.bfloat16


# ----------------------------------------------------------------------------
# Fused Pallas kernel: (banded conv1 + BN + LeakyReLU) -> (banded conv2 + BN +
# LeakyReLU).  B_tile images per grid step, intermediate stays in VMEM.
# ----------------------------------------------------------------------------
def _fused_cnn_kernel(x_ref, w1_ref, w2_ref, s1_ref, s2_ref, o_ref,
                      xpad_ref, ypad_ref):
    # x_ref:    (Bt, H, W*Cin)       activation rows (width*channel on lanes)
    # w1_ref:   (3, W*Cin,  W*Cout)  banded conv1 weights (BN scale folded in)
    # w2_ref:   (3, W*Cout, W*Cout)  banded conv2 weights (BN scale folded in)
    # s1_ref:   (1, W*Cout)          conv1 bias + BN shift, tiled over width
    # s2_ref:   (1, W*Cout)          conv2 bias + BN shift, tiled over width
    # o_ref:    (Bt, H, W*Cout)
    # xpad_ref: (Bt*(H+2), W*Cin)    VMEM: Bt images stacked on M, 1 zero halo
    # ypad_ref: (Bt*(H+2), W*Cout)   row above/below each image (vert. padding)
    b_tile, h, wcin = x_ref.shape
    wcout = o_ref.shape[2]
    hp = h + 2
    m_pad = b_tile * hp
    m_acc = m_pad - 2            # rows fed to each banded MXU pass

    # ---- stage input with vertical halos ------------------------------------
    # Only halo rows need zeroing (interior rows are fully rewritten each
    # step); done every step because scratch is per-TensorCore under a
    # "parallel" grid, so program_id()==0 is not a safe init gate.
    for b in range(b_tile):                        # static unroll
        base = b * hp
        xpad_ref[pl.ds(base, 1), :] = jnp.zeros((1, wcin), xpad_ref.dtype)
        xpad_ref[pl.ds(base + h + 1, 1), :] = jnp.zeros((1, wcin), xpad_ref.dtype)
        xpad_ref[pl.ds(base + 1, h), :] = x_ref[b]
    ypad_ref[pl.ds(0, 1), :] = jnp.zeros((1, wcout), ypad_ref.dtype)
    ypad_ref[pl.ds(m_pad - 1, 1), :] = jnp.zeros((1, wcout), ypad_ref.dtype)

    # ---- conv1: three banded MXU passes (dy = 0..2) -------------------------
    acc = jnp.dot(xpad_ref[pl.ds(0, m_acc), :], w1_ref[0],
                  preferred_element_type=jnp.float32)
    for dy in (1, 2):                              # static unroll
        acc += jnp.dot(xpad_ref[pl.ds(dy, m_acc), :], w1_ref[dy],
                       preferred_element_type=jnp.float32)
    y1 = acc + s1_ref[...]                         # conv bias + BN shift (f32)
    y1 = jnp.where(y1 >= 0, y1, LEAKY_SLOPE * y1)  # LeakyReLU
    # Dropout(0.3): identity in eval mode.

    # Junk rows between stacked images become the zero halos of conv2's input.
    if b_tile > 1:
        row = jax.lax.broadcasted_iota(jnp.int32, (m_acc, 1), 0)
        y1 = jnp.where((row % hp) < h, y1, 0.0)
    ypad_ref[pl.ds(1, m_acc), :] = y1.astype(ypad_ref.dtype)

    # ---- conv2: intermediate never leaves VMEM ------------------------------
    acc = jnp.dot(ypad_ref[pl.ds(0, m_acc), :], w2_ref[0],
                  preferred_element_type=jnp.float32)
    for dy in (1, 2):
        acc += jnp.dot(ypad_ref[pl.ds(dy, m_acc), :], w2_ref[dy],
                       preferred_element_type=jnp.float32)
    y2 = acc + s2_ref[...]
    y2 = jnp.where(y2 >= 0, y2, LEAKY_SLOPE * y2)
    # Dropout(0.4): identity in eval mode.

    for b in range(b_tile):
        o_ref[b] = y2[b * hp:b * hp + h].astype(o_ref.dtype)


# ----------------------------------------------------------------------------
# Wrapper-side weight preparation (tiny; hoisted — done once per param set)
# ----------------------------------------------------------------------------
def _banded_weight(w_oihw, scale, width, dtype):
    """Expand a 3x3 conv weight into 3 block-banded (W*Cin, W*Cout) matrices.

    big[dy, p*Cin + ci, w*Cout + co] = W[dy, dx, ci, co] * scale[co]
        where p = w + dx - 1; out-of-range taps are dropped, which implements
        the horizontal zero padding.  BN scale is folded in along Cout.
    """
    c_out, c_in, _, _ = w_oihw.shape
    w = jnp.transpose(w_oihw, (2, 3, 1, 0)) * scale[None, None, None, :]
    dx = jnp.arange(3)
    p = jnp.arange(width)
    q = jnp.arange(width)
    ind = (p[None, :, None] == q[None, None, :] + dx[:, None, None] - 1)
    big = jnp.einsum("xpw,yxio->ypiwo", ind.astype(w.dtype), w)
    return big.reshape(3, width * c_in, width * c_out).astype(dtype)


def _pad_channels_for_lanes(c, width):
    """Smallest channel pad so width*c is a multiple of 128 (lane-dense)."""
    step = 128 // math.gcd(width, 128)
    c_pad = -(-c // step) * step
    return c_pad if c_pad <= max(2 * c, c + 8) else c


def _choose_batch_tile(n, h):
    """Images stacked per grid step: target M ~ 256 rows, keep >=2 steps for
    v7x's two TensorCores when N allows, and divide N evenly."""
    target = max(1, 256 // (h + 2))
    if n >= 2:
        target = min(target, max(1, n // 2))
    b_tile = max(1, min(n, target))
    while n % b_tile:
        b_tile -= 1
    return b_tile


def prepare_cnn_params(p, width):
    """Fold BN (eval) into the conv weights and build banded bf16 weights."""
    c_out, c_in = p["w1"].shape[0], p["w1"].shape[1]
    c_in_pad = _pad_channels_for_lanes(c_in, width)

    scale1 = p["gamma1"] / jnp.sqrt(p["var1"] + BN_EPS)
    shift1 = (p["b1"] - p["mean1"]) * scale1 + p["beta1"]
    scale2 = p["gamma2"] / jnp.sqrt(p["var2"] + BN_EPS)
    shift2 = (p["b2"] - p["mean2"]) * scale2 + p["beta2"]

    w1 = jnp.pad(p["w1"], ((0, 0), (0, c_in_pad - c_in), (0, 0), (0, 0)))
    return {
        "bw1": _banded_weight(w1, scale1, width, MXU_INPUT_DTYPE),
        "bw2": _banded_weight(p["w2"], scale2, width, MXU_INPUT_DTYPE),
        "s1": jnp.tile(shift1, width).reshape(1, width * c_out).astype(jnp.float32),
        "s2": jnp.tile(shift2, width).reshape(1, width * c_out).astype(jnp.float32),
    }


def cnn_layer_forward(x_nchw, prepared):
    n, c_in, h, w = x_nchw.shape
    wcin = prepared["bw1"].shape[1]
    wcout = prepared["bw2"].shape[1]
    c_in_pad = wcin // w
    c_out = wcout // w
    b_tile = _choose_batch_tile(n, h)

    # NCHW -> (N, H, W*Cin_pad): channels zero-padded so W*Cin is lane-dense
    # (128).  No im2col / 9x expansion, no per-block HBM round trip.
    x = x_nchw
    if c_in_pad > c_in:
        x = jnp.pad(x, ((0, 0), (0, c_in_pad - c_in), (0, 0), (0, 0)))
    x_rows = jnp.transpose(x, (0, 2, 3, 1)).reshape(n, h, wcin)
    x_rows = x_rows.astype(MXU_INPUT_DTYPE)

    # VMEM use (weights + blocks + scratch, double-buffered) is well under the
    # default scoped limit at these shapes; set vmem_limit_bytes when scaling.
    out = pl.pallas_call(
        _fused_cnn_kernel,
        out_shape=jax.ShapeDtypeStruct((n, h, wcout), jnp.float32),
        grid=(n // b_tile,),
        in_specs=[
            pl.BlockSpec((b_tile, h, wcin), lambda g: (g, 0, 0)),
            pl.BlockSpec((3, wcin, wcout), lambda g: (0, 0, 0)),
            pl.BlockSpec((3, wcout, wcout), lambda g: (0, 0, 0)),
            pl.BlockSpec((1, wcout), lambda g: (0, 0)),
            pl.BlockSpec((1, wcout), lambda g: (0, 0)),
        ],
        out_specs=pl.BlockSpec((b_tile, h, wcout), lambda g: (g, 0, 0)),
        scratch_shapes=[
            pltpu.VMEM((b_tile * (h + 2), wcin), MXU_INPUT_DTYPE),
            pltpu.VMEM((b_tile * (h + 2), wcout), MXU_INPUT_DTYPE),
        ],
        compiler_params=pltpu.CompilerParams(
            dimension_semantics=("parallel",)),   # shards batch over v7x's 2 TCs
    )(x_rows, prepared["bw1"], prepared["bw2"], prepared["s1"], prepared["s2"])

    # (N, H, W*Cout) -> NCHW to match the PyTorch module interface.
    return jnp.transpose(out.reshape(n, h, w, c_out), (0, 3, 1, 2))


# ----------------------------------------------------------------------------
# Deterministic parameter init (shapes from the PyTorch module __init__)
# ----------------------------------------------------------------------------
def init_params(key, c_in, c_out):
    ks = jax.random.split(key, 12)
    f32 = jnp.float32
    return {
        "w1": 0.1 * jax.random.normal(ks[0], (c_out, c_in, 3, 3), f32),
        "b1": 0.05 * jax.random.normal(ks[1], (c_out,), f32),
        "gamma1": 1.0 + 0.1 * jax.random.normal(ks[2], (c_out,), f32),
        "beta1": 0.05 * jax.random.normal(ks[3], (c_out,), f32),
        "mean1": 0.02 * jax.random.normal(ks[4], (c_out,), f32),
        "var1": 0.5 + jax.random.uniform(ks[5], (c_out,), f32),
        "w2": 0.1 * jax.random.normal(ks[6], (c_out, c_out, 3, 3), f32),
        "b2": 0.05 * jax.random.normal(ks[7], (c_out,), f32),
        "gamma2": 1.0 + 0.1 * jax.random.normal(ks[8], (c_out,), f32),
        "beta2": 0.05 * jax.random.normal(ks[9], (c_out,), f32),
        "mean2": 0.02 * jax.random.normal(ks[10], (c_out,), f32),
        "var2": 0.5 + jax.random.uniform(ks[11], (c_out,), f32),
    }


# ----------------------------------------------------------------------------
# Pure-JAX reference (NCHW, PyTorch eval-mode semantics, f32)
# ----------------------------------------------------------------------------
def reference_forward(x_nchw, p):
    def block(x, w, b, gamma, beta, mean, var):
        y = jax.lax.conv_general_dilated(
            x, jnp.transpose(w, (2, 3, 1, 0)),       # OIHW -> HWIO
            window_strides=(1, 1), padding=((1, 1), (1, 1)),
            dimension_numbers=("NCHW", "HWIO", "NCHW"))
        y = y + b[None, :, None, None]
        y = (y - mean[None, :, None, None]) / jnp.sqrt(var + BN_EPS)[None, :, None, None]
        y = y * gamma[None, :, None, None] + beta[None, :, None, None]
        return jnp.where(y >= 0, y, LEAKY_SLOPE * y)

    y = block(x_nchw, p["w1"], p["b1"], p["gamma1"], p["beta1"], p["mean1"], p["var1"])
    y = block(y, p["w2"], p["b2"], p["gamma2"], p["beta2"], p["mean2"], p["var2"])
    return y


if __name__ == "__main__":
    key = jax.random.PRNGKey(0)
    kx, kp = jax.random.split(key)

    N, C_in, C_out, H, W = 2, 4, 8, 16, 16
    x = jax.random.normal(kx, (N, C_in, H, W), jnp.float32)   # PyTorch NCHW input
    params = init_params(kp, C_in, C_out)

    prepared = prepare_cnn_params(params, W)   # hoisted: weight prep done once
    fwd = jax.jit(cnn_layer_forward)
    y = jax.block_until_ready(fwd(x, prepared))
    assert y.shape == (N, C_out, H, W) and y.dtype == jnp.float32

    y_ref = reference_forward(x, params)
    err = float(jnp.max(jnp.abs(y - y_ref)))
    # bf16 MXU inputs (f32 accumulation) -> looser tolerance than the pure-f32
    # variant's 1e-4.
    assert jnp.allclose(y, y_ref, atol=5e-2, rtol=5e-2), f"max abs err {err}"

    print("KERNEL_OK")
</pallas_src>

<mosaic_0001>
module attributes {stable_mosaic.version = 11 : i64} {
  func.func @_fused_cnn_kernel(%arg0: i32, %arg1: memref<1x16x128xbf16, #tpu.memory_space<vmem>>, %arg2: memref<3x128x128xbf16, #tpu.memory_space<vmem>>, %arg3: memref<3x128x128xbf16, #tpu.memory_space<vmem>>, %arg4: memref<1x128xf32, #tpu.memory_space<vmem>>, %arg5: memref<1x128xf32, #tpu.memory_space<vmem>>, %arg6: memref<1x16x128xf32, #tpu.memory_space<vmem>>, %arg7: memref<18x128xbf16, #tpu.memory_space<vmem>>, %arg8: memref<18x128xbf16, #tpu.memory_space<vmem>>) attributes {dimension_semantics = [#tpu.dimension_semantics<parallel>], iteration_bounds = array<i64: 2>, scalar_prefetch = 0 : i64, scratch_operands = 2 : i64, tpu.core_type = #tpu.core_type<tc>, window_params = [{transform_indices = @transform_0, window_bounds = array<i64: 1, 16, 128>}, {pipeline_mode = #tpu.pipeline_mode<synchronous>, transform_indices = @transform_1, window_bounds = array<i64: 3, 128, 128>}, {pipeline_mode = #tpu.pipeline_mode<synchronous>, transform_indices = @transform_2, window_bounds = array<i64: 3, 128, 128>}, {pipeline_mode = #tpu.pipeline_mode<synchronous>, transform_indices = @transform_3, window_bounds = array<i64: 1, 128>}, {pipeline_mode = #tpu.pipeline_mode<synchronous>, transform_indices = @transform_4, window_bounds = array<i64: 1, 128>}, {transform_indices = @transform_5, window_bounds = array<i64: 1, 16, 128>}]} {
    %cst = arith.constant 0.000000e+00 : bf16
    %0 = vector.broadcast %cst : bf16 to vector<1x128xbf16>
    %c0 = arith.constant 0 : index
    %c0_0 = arith.constant 0 : index
    %1 = vector.load %arg7[%c0, %c0_0] : memref<18x128xbf16, #tpu.memory_space<vmem>>, vector<1x128xbf16>
    tpu.vector_store %arg7[%c0, %c0_0], %0 {strides = array<i32>} : memref<18x128xbf16, #tpu.memory_space<vmem>>, vector<1x128xbf16>,
    %cst_1 = arith.constant 0.000000e+00 : bf16
    %2 = vector.broadcast %cst_1 : bf16 to vector<1x128xbf16>
    %c17 = arith.constant 17 : index
    %c0_2 = arith.constant 0 : index
    %3 = vector.load %arg7[%c17, %c0_2] : memref<18x128xbf16, #tpu.memory_space<vmem>>, vector<1x128xbf16>
    tpu.vector_store %arg7[%c17, %c0_2], %2 {strides = array<i32>} : memref<18x128xbf16, #tpu.memory_space<vmem>>, vector<1x128xbf16>,
    %c0_3 = arith.constant 0 : index
    %c0_4 = arith.constant 0 : index
    %c0_5 = arith.constant 0 : index
    %4 = vector.load %arg1[%c0_3, %c0_4, %c0_5] : memref<1x16x128xbf16, #tpu.memory_space<vmem>>, vector<1x16x128xbf16>
    %5 = vector.shape_cast %4 : vector<1x16x128xbf16> to vector<16x128xbf16>
    %c1 = arith.constant 1 : index
    %c0_6 = arith.constant 0 : index
    %6 = vector.load %arg7[%c1, %c0_6] : memref<18x128xbf16, #tpu.memory_space<vmem>>, vector<16x128xbf16>
    tpu.vector_store %arg7[%c1, %c0_6], %5 {strides = array<i32>} : memref<18x128xbf16, #tpu.memory_space<vmem>>, vector<16x128xbf16>,
    %cst_7 = arith.constant 0.000000e+00 : bf16
    %7 = vector.broadcast %cst_7 : bf16 to vector<1x128xbf16>
    %c0_8 = arith.constant 0 : index
    %c0_9 = arith.constant 0 : index
    %8 = vector.load %arg8[%c0_8, %c0_9] : memref<18x128xbf16, #tpu.memory_space<vmem>>, vector<1x128xbf16>
    tpu.vector_store %arg8[%c0_8, %c0_9], %7 {strides = array<i32>} : memref<18x128xbf16, #tpu.memory_space<vmem>>, vector<1x128xbf16>,
    %cst_10 = arith.constant 0.000000e+00 : bf16
    %9 = vector.broadcast %cst_10 : bf16 to vector<1x128xbf16>
    %c17_11 = arith.constant 17 : index
    %c0_12 = arith.constant 0 : index
    %10 = vector.load %arg8[%c17_11, %c0_12] : memref<18x128xbf16, #tpu.memory_space<vmem>>, vector<1x128xbf16>
    tpu.vector_store %arg8[%c17_11, %c0_12], %9 {strides = array<i32>} : memref<18x128xbf16, #tpu.memory_space<vmem>>, vector<1x128xbf16>,
    %c0_13 = arith.constant 0 : index
    %c0_14 = arith.constant 0 : index
    %11 = vector.load %arg7[%c0_13, %c0_14] : memref<18x128xbf16, #tpu.memory_space<vmem>>, vector<16x128xbf16>
    %c0_15 = arith.constant 0 : index
    %c0_16 = arith.constant 0 : index
    %c0_17 = arith.constant 0 : index
    %12 = vector.load %arg2[%c0_15, %c0_16, %c0_17] : memref<3x128x128xbf16, #tpu.memory_space<vmem>>, vector<1x128x128xbf16>
    %13 = vector.shape_cast %12 : vector<1x128x128xbf16> to vector<128x128xbf16>
    %cst_18 = arith.constant dense<0.000000e+00> : vector<16x128xf32>
    %14 = tpu.matmul %11, %13, %cst_18 {dimension_numbers = #tpu.dot_dimension_numbers<[1], [0], [0], [1], [0, 0, 1, 1], [], []>} : vector<16x128xbf16>, vector<128x128xbf16>, vector<16x128xf32> -> vector<16x128xf32>
    %c1_19 = arith.constant 1 : index
    %c0_20 = arith.constant 0 : index
    %15 = vector.load %arg7[%c1_19, %c0_20] : memref<18x128xbf16, #tpu.memory_space<vmem>>, vector<16x128xbf16>
    %c1_21 = arith.constant 1 : index
    %c0_22 = arith.constant 0 : index
    %c0_23 = arith.constant 0 : index
    %16 = vector.load %arg2[%c1_21, %c0_22, %c0_23] : memref<3x128x128xbf16, #tpu.memory_space<vmem>>, vector<1x128x128xbf16>
    %17 = vector.shape_cast %16 : vector<1x128x128xbf16> to vector<128x128xbf16>
    %cst_24 = arith.constant dense<0.000000e+00> : vector<16x128xf32>
    %18 = tpu.matmul %15, %17, %cst_24 {dimension_numbers = #tpu.dot_dimension_numbers<[1], [0], [0], [1], [0, 0, 1, 1], [], []>} : vector<16x128xbf16>, vector<128x128xbf16>, vector<16x128xf32> -> vector<16x128xf32>
    %19 = arith.addf %14, %18 : vector<16x128xf32>
    %c2 = arith.constant 2 : index
    %c0_25 = arith.constant 0 : index
    %20 = vector.load %arg7[%c2, %c0_25] : memref<18x128xbf16, #tpu.memory_space<vmem>>, vector<16x128xbf16>
    %c2_26 = arith.constant 2 : index
    %c0_27 = arith.constant 0 : index
    %c0_28 = arith.constant 0 : index
    %21 = vector.load %arg2[%c2_26, %c0_27, %c0_28] : memref<3x128x128xbf16, #tpu.memory_space<vmem>>, vector<1x128x128xbf16>
    %22 = vector.shape_cast %21 : vector<1x128x128xbf16> to vector<128x128xbf16>
    %cst_29 = arith.constant dense<0.000000e+00> : vector<16x128xf32>
    %23 = tpu.matmul %20, %22, %cst_29 {dimension_numbers = #tpu.dot_dimension_numbers<[1], [0], [0], [1], [0, 0, 1, 1], [], []>} : vector<16x128xbf16>, vector<128x128xbf16>, vector<16x128xf32> -> vector<16x128xf32>
    %24 = arith.addf %19, %23 : vector<16x128xf32>
    %c0_30 = arith.constant 0 : index
    %c0_31 = arith.constant 0 : index
    %25 = vector.load %arg4[%c0_30, %c0_31] : memref<1x128xf32, #tpu.memory_space<vmem>>, vector<1x128xf32>
    %26 = vector.broadcast %25 : vector<1x128xf32> to vector<16x128xf32>
    %27 = arith.addf %24, %26 : vector<16x128xf32>
    %cst_32 = arith.constant 0.000000e+00 : f32
    %28 = vector.broadcast %cst_32 : f32 to vector<16x128xf32>
    %29 = arith.cmpf oge, %27, %28 : vector<16x128xf32>
    %cst_33 = arith.constant 0.00999999977 : f32
    %30 = vector.broadcast %cst_33 : f32 to vector<16x128xf32>
    %31 = arith.mulf %30, %27 : vector<16x128xf32>
    %32 = arith.select %29, %27, %31 : vector<16x128xi1>, vector<16x128xf32>
    %33 = arith.truncf %32 : vector<16x128xf32> to vector<16x128xbf16>
    %c1_34 = arith.constant 1 : index
    %c0_35 = arith.constant 0 : index
    %34 = vector.load %arg8[%c1_34, %c0_35] : memref<18x128xbf16, #tpu.memory_space<vmem>>, vector<16x128xbf16>
    tpu.vector_store %arg8[%c1_34, %c0_35], %33 {strides = array<i32>} : memref<18x128xbf16, #tpu.memory_space<vmem>>, vector<16x128xbf16>,
    %c0_36 = arith.constant 0 : index
    %c0_37 = arith.constant 0 : index
    %35 = vector.load %arg8[%c0_36, %c0_37] : memref<18x128xbf16, #tpu.memory_space<vmem>>, vector<16x128xbf16>
    %c0_38 = arith.constant 0 : index
    %c0_39 = arith.constant 0 : index
    %c0_40 = arith.constant 0 : index
    %36 = vector.load %arg3[%c0_38, %c0_39, %c0_40] : memref<3x128x128xbf16, #tpu.memory_space<vmem>>, vector<1x128x128xbf16>
    %37 = vector.shape_cast %36 : vector<1x128x128xbf16> to vector<128x128xbf16>
    %cst_41 = arith.constant dense<0.000000e+00> : vector<16x128xf32>
    %38 = tpu.matmul %35, %37, %cst_41 {dimension_numbers = #tpu.dot_dimension_numbers<[1], [0], [0], [1], [0, 0, 1, 1], [], []>} : vector<16x128xbf16>, vector<128x128xbf16>, vector<16x128xf32> -> vector<16x128xf32>
    %c1_42 = arith.constant 1 : index
    %c0_43 = arith.constant 0 : index
    %39 = vector.load %arg8[%c1_42, %c0_43] : memref<18x128xbf16, #tpu.memory_space<vmem>>, vector<16x128xbf16>
    %c1_44 = arith.constant 1 : index
    %c0_45 = arith.constant 0 : index
    %c0_46 = arith.constant 0 : index
    %40 = vector.load %arg3[%c1_44, %c0_45, %c0_46] : memref<3x128x128xbf16, #tpu.memory_space<vmem>>, vector<1x128x128xbf16>
    %41 = vector.shape_cast %40 : vector<1x128x128xbf16> to vector<128x128xbf16>
    %cst_47 = arith.constant dense<0.000000e+00> : vector<16x128xf32>
    %42 = tpu.matmul %39, %41, %cst_47 {dimension_numbers = #tpu.dot_dimension_numbers<[1], [0], [0], [1], [0, 0, 1, 1], [], []>} : vector<16x128xbf16>, vector<128x128xbf16>, vector<16x128xf32> -> vector<16x128xf32>
    %43 = arith.addf %38, %42 : vector<16x128xf32>
    %c2_48 = arith.constant 2 : index
    %c0_49 = arith.constant 0 : index
    %44 = vector.load %arg8[%c2_48, %c0_49] : memref<18x128xbf16, #tpu.memory_space<vmem>>, vector<16x128xbf16>
    %c2_50 = arith.constant 2 : index
    %c0_51 = arith.constant 0 : index
    %c0_52 = arith.constant 0 : index
    %45 = vector.load %arg3[%c2_50, %c0_51, %c0_52] : memref<3x128x128xbf16, #tpu.memory_space<vmem>>, vector<1x128x128xbf16>
    %46 = vector.shape_cast %45 : vector<1x128x128xbf16> to vector<128x128xbf16>
    %cst_53 = arith.constant dense<0.000000e+00> : vector<16x128xf32>
    %47 = tpu.matmul %44, %46, %cst_53 {dimension_numbers = #tpu.dot_dimension_numbers<[1], [0], [0], [1], [0, 0, 1, 1], [], []>} : vector<16x128xbf16>, vector<128x128xbf16>, vector<16x128xf32> -> vector<16x128xf32>
    %48 = arith.addf %43, %47 : vector<16x128xf32>
    %c0_54 = arith.constant 0 : index
    %c0_55 = arith.constant 0 : index
    %49 = vector.load %arg5[%c0_54, %c0_55] : memref<1x128xf32, #tpu.memory_space<vmem>>, vector<1x128xf32>
    %50 = vector.broadcast %49 : vector<1x128xf32> to vector<16x128xf32>
    %51 = arith.addf %48, %50 : vector<16x128xf32>
    %cst_56 = arith.constant 0.000000e+00 : f32
    %52 = vector.broadcast %cst_56 : f32 to vector<16x128xf32>
    %53 = arith.cmpf oge, %51, %52 : vector<16x128xf32>
    %cst_57 = arith.constant 0.00999999977 : f32
    %54 = vector.broadcast %cst_57 : f32 to vector<16x128xf32>
    %55 = arith.mulf %54, %51 : vector<16x128xf32>
    %56 = arith.select %53, %51, %55 : vector<16x128xi1>, vector<16x128xf32>
    %c0_58 = arith.constant 0 : index
    %c0_59 = arith.constant 0 : index
    %c0_60 = arith.constant 0 : index
    %57 = vector.load %arg6[%c0_58, %c0_59, %c0_60] : memref<1x16x128xf32, #tpu.memory_space<vmem>>, vector<1x16x128xf32>
    %58 = vector.shape_cast %57 : vector<1x16x128xf32> to vector<16x128xf32>
    %59 = vector.shape_cast %56 : vector<16x128xf32> to vector<1x16x128xf32>
    tpu.vector_store %arg6[%c0_58, %c0_59, %c0_60], %59 {strides = array<i32>} : memref<1x16x128xf32, #tpu.memory_space<vmem>>, vector<1x16x128xf32>,
    return
  }
  func.func @transform_0(%arg0: i32) -> (i32, i32, i32) {
    %c0_i32 = arith.constant 0 : i32
    %c0_i32_0 = arith.constant 0 : i32
    %c0_i32_1 = arith.constant 0 : i32
    return %arg0, %c0_i32, %c0_i32_0 : i32, i32, i32
  }
  func.func @transform_1(%arg0: i32) -> (i32, i32, i32) {
    %c0_i32 = arith.constant 0 : i32
    %c0_i32_0 = arith.constant 0 : i32
    %c0_i32_1 = arith.constant 0 : i32
    %c0_i32_2 = arith.constant 0 : i32
    return %c0_i32, %c0_i32_0, %c0_i32_1 : i32, i32, i32
  }
  func.func @transform_2(%arg0: i32) -> (i32, i32, i32) {
    %c0_i32 = arith.constant 0 : i32
    %c0_i32_0 = arith.constant 0 : i32
    %c0_i32_1 = arith.constant 0 : i32
    %c0_i32_2 = arith.constant 0 : i32
    return %c0_i32, %c0_i32_0, %c0_i32_1 : i32, i32, i32
  }
  func.func @transform_3(%arg0: i32) -> (i32, i32) {
    %c0_i32 = arith.constant 0 : i32
    %c0_i32_0 = arith.constant 0 : i32
    %c0_i32_1 = arith.constant 0 : i32
    return %c0_i32, %c0_i32_0 : i32, i32
  }
  func.func @transform_4(%arg0: i32) -> (i32, i32) {
    %c0_i32 = arith.constant 0 : i32
    %c0_i32_0 = arith.constant 0 : i32
    %c0_i32_1 = arith.constant 0 : i32
    return %c0_i32, %c0_i32_0 : i32, i32
  }
  func.func @transform_5(%arg0: i32) -> (i32, i32, i32) {
    %c0_i32 = arith.constant 0 : i32
    %c0_i32_0 = arith.constant 0 : i32
    %c0_i32_1 = arith.constant 0 : i32
    return %arg0, %c0_i32, %c0_i32_0 : i32, i32, i32
  }
}

</mosaic_0001>

<llo_original>
// kernel: cnn_layer_forward.1
$region0: #{cnn_layer_forward.1}
  #allocation0 [shape = 'u32[]', space=smem, size = 0x4, offset = 0x4, fixed_abs, tag = 'smem constant byte address 0x4 - core index']
  #allocation1 [shape = 'u32[72,128]{1,0:T(1,128)}', space=vmem, size = 0x9000, scoped, tag = 'internal scratch']
  #allocation2 [shape = 'bf16[18,128]{1,0:T(8,128)(2,1)}', space=vmem, size = 0x1800, scoped, tag = 'scratch operand']
  #allocation3 [shape = 'bf16[18,128]{1,0:T(8,128)(2,1)}', space=vmem, size = 0x1800, scoped, tag = 'scratch operand']
  %s0 = inlined_call_operand.vmem [shape: bf16[2,16,128], index: 0, kind: input, shape index: {}]
  %s1 = inlined_call_operand.vmem [shape: bf16[3,128,128], index: 1, kind: input, shape index: {}]
  %s2 = inlined_call_operand.vmem [shape: bf16[3,128,128], index: 2, kind: input, shape index: {}]
  %s3 = inlined_call_operand.vmem [shape: f32[1,128], index: 3, kind: input, shape index: {}]
  %s4 = inlined_call_operand.vmem [shape: f32[1,128], index: 4, kind: input, shape index: {}]
  %s5 = inlined_call_operand.vmem [shape: f32[2,16,128], index: 5, kind: output, shape index: {}]
  %s6 = sld [smem:[#allocation0]]
  $region53: #{cnn_layer_forward.1} parent=0
    _
  %s8 = ssub.s32 1, %s6
  %s9 = scalar_select 0, %s8, %s6
  loop: start=0, step=1, limit=4
  $region2: #{cnn_layer_forward.1} parent=0 // loop_pre_header
    _
  $region3: #{cnn_layer_forward.1} parent=0 // loop_header
    %s11 = sphi 0, %s15
    %p12 = scmp.ge.s32.totalorder %s11, 4
    %s21 = sphi 0, %s23
    %s24 = sphi 0, %s21
    %s25 = sphi 0, %s24
    %s41 = sphi 0, %s25
    %s45 = sphi 0, %s45
    %s47 = sphi 0, %s45
    %s48 = sphi 0, %s47
    %s62 = sphi 0, %s48
    %s66 = sphi 0, %s66
    %s68 = sphi 0, %s66
    %s69 = sphi 0, %s68
    %s83 = sphi 0, %s69
    %s87 = sphi 0, %s87
    %s89 = sphi 0, %s87
    %s90 = sphi 0, %s89
    %s104 = sphi 0, %s90
    %s108 = sphi 0, %s108
    %s110 = sphi 0, %s108
    %s111 = sphi 0, %s110
    %s125 = sphi 0, %s111
    %s131 = sphi 0, %s133
    %s134 = sphi 0, %s131
    %s135 = sphi 0, %s134
    %s151 = sphi 0, %s135
  $region4: #{cnn_layer_forward.1} parent=0 // loop_header_branch
    %14 = sbr.rel (%p12) target = $region8
  $region5: #{cnn_layer_forward.1} parent=0 // loop_body
    %s16 = ssub.s32 %s11, 1
    %s17 = ssub.s32 %s11, 2
    %s18 = sadd.s32 %s11, 1
    %s19 = ssub.s32 %s11, %s18
    %p20 = scmp.eq.s32.totalorder %s19, 0
    %s22 = sadd.s32 %s21, 1
    %s23 = scalar_select %p20, %s21, %s22
    %p26 = pneg %p20
    %p27 = scmp.eq.s32.totalorder %s11, 1
    %p28 = por %p26, %p27
    %p29 = scmp.ne.s32.totalorder %s21, %s24
    %p30 = scmp.eq.s32.totalorder %s11, 0
    %p31 = por %p29, %p30
    %p32 = scmp.ne.s32.totalorder %s21, %s24
    %p33 = scmp.eq.s32.totalorder %s16, 1
    %p34 = por %p32, %p33
    %p35 = scmp.ne.s32.totalorder %s24, %s25
    %p36 = scmp.eq.s32.totalorder %s16, 0
    %p37 = por %p35, %p36
    %p38 = scmp.ne.s32.totalorder %s24, %s25
    %p39 = scmp.eq.s32.totalorder %s17, 1
    %p40 = por %p38, %p39
    %p42 = scmp.ne.s32.totalorder %s25, %s41
    %p43 = scmp.eq.s32.totalorder %s17, 0
    %p44 = por %p42, %p43
    %s46 = sadd.s32 %s45, 1
    %p49 = scmp.eq.s32.totalorder %s11, 1
    %p50 = scmp.ne.s32.totalorder %s45, %s47
    %p51 = scmp.eq.s32.totalorder %s11, 0
    %p52 = por %p50, %p51
    %p53 = scmp.ne.s32.totalorder %s45, %s47
    %p54 = scmp.eq.s32.totalorder %s16, 1
    %p55 = por %p53, %p54
    %p56 = scmp.ne.s32.totalorder %s47, %s48
    %p57 = scmp.eq.s32.totalorder %s16, 0
    %p58 = por %p56, %p57
    %p59 = scmp.ne.s32.totalorder %s47, %s48
    %p60 = scmp.eq.s32.totalorder %s17, 1
    %p61 = por %p59, %p60
    %p63 = scmp.ne.s32.totalorder %s48, %s62
    %p64 = scmp.eq.s32.totalorder %s17, 0
    %p65 = por %p63, %p64
    %s67 = sadd.s32 %s66, 1
    %p70 = scmp.eq.s32.totalorder %s11, 1
    %p71 = scmp.ne.s32.totalorder %s66, %s68
    %p72 = scmp.eq.s32.totalorder %s11, 0
    %p73 = por %p71, %p72
    %p74 = scmp.ne.s32.totalorder %s66, %s68
    %p75 = scmp.eq.s32.totalorder %s16, 1
    %p76 = por %p74, %p75
    %p77 = scmp.ne.s32.totalorder %s68, %s69
    %p78 = scmp.eq.s32.totalorder %s16, 0
    %p79 = por %p77, %p78
    %p80 = scmp.ne.s32.totalorder %s68, %s69
    %p81 = scmp.eq.s32.totalorder %s17, 1
    %p82 = por %p80, %p81
    %p84 = scmp.ne.s32.totalorder %s69, %s83
    %p85 = scmp.eq.s32.totalorder %s17, 0
    %p86 = por %p84, %p85
    %s88 = sadd.s32 %s87, 1
    %p91 = scmp.eq.s32.totalorder %s11, 1
    %p92 = scmp.ne.s32.totalorder %s87, %s89
    %p93 = scmp.eq.s32.totalorder %s11, 0
    %p94 = por %p92, %p93
    %p95 = scmp.ne.s32.totalorder %s87, %s89
    %p96 = scmp.eq.s32.totalorder %s16, 1
    %p97 = por %p95, %p96
    %p98 = scmp.ne.s32.totalorder %s89, %s90
    %p99 = scmp.eq.s32.totalorder %s16, 0
    %p100 = por %p98, %p99
    %p101 = scmp.ne.s32.totalorder %s89, %s90
    %p102 = scmp.eq.s32.totalorder %s17, 1
    %p103 = por %p101, %p102
    %p105 = scmp.ne.s32.totalorder %s90, %s104
    %p106 = scmp.eq.s32.totalorder %s17, 0
    %p107 = por %p105, %p106
    %s109 = sadd.s32 %s108, 1
    %p112 = scmp.eq.s32.totalorder %s11, 1
    %p113 = scmp.ne.s32.totalorder %s108, %s110
    %p114 = scmp.eq.s32.totalorder %s11, 0
    %p115 = por %p113, %p114
    %p116 = scmp.ne.s32.totalorder %s108, %s110
    %p117 = scmp.eq.s32.totalorder %s16, 1
    %p118 = por %p116, %p117
    %p119 = scmp.ne.s32.totalorder %s110, %s111
    %p120 = scmp.eq.s32.totalorder %s16, 0
    %p121 = por %p119, %p120
    %p122 = scmp.ne.s32.totalorder %s110, %s111
    %p123 = scmp.eq.s32.totalorder %s17, 1
    %p124 = por %p122, %p123
    %p126 = scmp.ne.s32.totalorder %s111, %s125
    %p127 = scmp.eq.s32.totalorder %s17, 0
    %p128 = por %p126, %p127
    %s129 = ssub.s32 %s11, %s18
    %p130 = scmp.eq.s32.totalorder %s129, 0
    %s132 = sadd.s32 %s131, 1
    %s133 = scalar_select %p130, %s131, %s132
    %p136 = pneg %p130
    %p137 = scmp.eq.s32.totalorder %s11, 1
    %p138 = por %p136, %p137
    %p139 = scmp.ne.s32.totalorder %s131, %s134
    %p140 = scmp.eq.s32.totalorder %s11, 0
    %p141 = por %p139, %p140
    %p142 = scmp.ne.s32.totalorder %s131, %s134
    %p143 = scmp.eq.s32.totalorder %s16, 1
    %p144 = por %p142, %p143
    %p145 = scmp.ne.s32.totalorder %s134, %s135
    %p146 = scmp.eq.s32.totalorder %s16, 0
    %p147 = por %p145, %p146
    %p148 = scmp.ne.s32.totalorder %s134, %s135
    %p149 = scmp.eq.s32.totalorder %s17, 1
    %p150 = por %p148, %p149
    %p152 = scmp.ne.s32.totalorder %s135, %s151
    %p153 = scmp.eq.s32.totalorder %s17, 0
    %p154 = por %p152, %p153
    %p155 = scmp.le.s32.totalorder 1, %s11
    %p156 = scmp.lt.s32.totalorder %s11, 3
    %p157 = pnand %p155, %p156
    %p158 = pneg %p157
    // Predicated region
    $region9: #{cnn_layer_forward.1} parent=5 // pred_check
      _
    $region10: #{cnn_layer_forward.1} parent=5 // pred_check_branch
      %160 = sbr.rel (%p157) target = $region12
    $region11: #{cnn_layer_forward.1} parent=5 // pred_region
      %s161 = ssub.s32 %s11, 1
      // Predicated region
      $region13: #{cnn_layer_forward.1} parent=11 // pred_check
        %p162 = pneg %p58
      $region14: #{cnn_layer_forward.1} parent=11 // pred_check_branch
        %164 = sbr.rel (%p162) target = $region16
      $region15: #{cnn_layer_forward.1} parent=11 // pred_region
        _
      $region16: #{cnn_layer_forward.1} parent=11 // pred_fallthru
        _
      // Predicated region
      $region17: #{cnn_layer_forward.1} parent=11 // pred_check
        %p165 = pneg %p79
      $region18: #{cnn_layer_forward.1} parent=11 // pred_check_branch
        %167 = sbr.rel (%p165) target = $region20
      $region19: #{cnn_layer_forward.1} parent=11 // pred_region
        _
      $region20: #{cnn_layer_forward.1} parent=11 // pred_fallthru
        _
      // Predicated region
      $region21: #{cnn_layer_forward.1} parent=11 // pred_check
        %p168 = pneg %p100
      $region22: #{cnn_layer_forward.1} parent=11 // pred_check_branch
        %170 = sbr.rel (%p168) target = $region24
      $region23: #{cnn_layer_forward.1} parent=11 // pred_region
        _
      $region24: #{cnn_layer_forward.1} parent=11 // pred_fallthru
        _
      // Predicated region
      $region25: #{cnn_layer_forward.1} parent=11 // pred_check
        %p171 = pneg %p121
      $region26: #{cnn_layer_forward.1} parent=11 // pred_check_branch
        %173 = sbr.rel (%p171) target = $region28
      $region27: #{cnn_layer_forward.1} parent=11 // pred_region
        _
      $region28: #{cnn_layer_forward.1} parent=11 // pred_fallthru
        _
    $region12: #{cnn_layer_forward.1} parent=5 // pred_fallthru
      _
    %p174 = scmp.lt.s32.totalorder %s11, 2
    // Predicated region
    $region29: #{cnn_layer_forward.1} parent=5 // pred_check
      %p175 = pneg %p174
    $region30: #{cnn_layer_forward.1} parent=5 // pred_check_branch
      %177 = sbr.rel (%p175) target = $region32
    $region31: #{cnn_layer_forward.1} parent=5 // pred_region
      // Predicated region
      $region33: #{cnn_layer_forward.1} parent=31 // pred_check
        %p178 = pneg %p31
      $region34: #{cnn_layer_forward.1} parent=31 // pred_check_branch
        %180 = sbr.rel (%p178) target = $region36
      $region35: #{cnn_layer_forward.1} parent=31 // pred_region
        %p181 = scmp.lt.s32.totalorder %s11, 1
        %s182 = scalar_select %p181, %s11, 1
        %s183 = smul.addr %s182, 2
        %s184 = smul.addr %s183, 4
        %s185 = scalar_lea.vmem %s0, %s184
      $region36: #{cnn_layer_forward.1} parent=31 // pred_fallthru
        _
    $region32: #{cnn_layer_forward.1} parent=5 // pred_fallthru
      _
    %p186 = scmp.le.s32.totalorder 1, %s11
    %p187 = scmp.lt.s32.totalorder %s11, 3
    %p188 = pnand %p186, %p187
    %p189 = pneg %p188
    // Predicated region
    $region37: #{cnn_layer_forward.1} parent=5 // pred_check
      _
    $region38: #{cnn_layer_forward.1} parent=5 // pred_check_branch
      %191 = sbr.rel (%p188) target = $region40
    $region39: #{cnn_layer_forward.1} parent=5 // pred_region
      %s192 = ssub.s32 %s11, 1
      %p193 = scmp.lt.s32.totalorder %s16, 1
      %s194 = scalar_select %p193, %s16, 1
      %s195 = smul.addr %s194, 2
      %s196 = smul.addr %s195, 4
      %s197 = scalar_lea.vmem %s0, %s196
      %p198 = pneg %p37
      %p199 = pneg %p34
      %p200 = pneg %p58
      %p201 = pneg %p55
      %p202 = pneg %p79
      %p203 = pneg %p76
      %p204 = pneg %p100
      %p205 = pneg %p97
      %p206 = pneg %p121
      %p207 = pneg %p118
      %p208 = pneg %p147
      %p209 = pneg %p144
      %p210 = scmp.lt.s32.totalorder %s16, 1
      %s211 = scalar_select %p210, %s16, 1
      %s212 = smul.addr %s211, 2
      %s213 = smul.addr %s212, 8
      %s214 = scalar_lea.vmem %s5, %s213
      %p215 = scmp.lt.s32.totalorder %s16, 1
      %s216 = scalar_select %p215, %s16, 1
      %s217 = smul.addr %s216, 2
      %s218 = smul.addr %s217, 4
      %s219 = scalar_lea.vmem %s0, %s218
      %p220 = scmp.lt.s32.totalorder %s16, 1
      %s221 = scalar_select %p220, %s16, 1
      %s222 = smul.addr %s221, 2
      %s223 = smul.addr %s222, 8
      %s224 = scalar_lea.vmem %s5, %s223
      %vm226 = vcmask 1040384
      %vm227 = vsmask.f32 256
      %vm228 = vmand %vm226, %vm227
      %v229 = vld [vmem:[#allocation2] sm:$0x1]
      %v230 = vsel %vm228, 0, %v229
      %231 = vst [vmem:[#allocation2] sm:$0x1] %v230
      %vm232 = vsmask.f32 7938
      %vm233 = vmand %vm226, %vm232
      %v234 = vld [vmem:[#allocation2 + $0x8] sm:$0x1]
      %v235 = vsel %vm233, 0, %v234
      %236 = vst [vmem:[#allocation2 + $0x8] sm:$0x1] %v235
      %v237 = vld [vmem:[%s219] sm:$0xf]
      %v238 = vld [vmem:[%s219 + $0x4] sm:$0xf]
      %vm239 = vsmask.f32 4368
      %vm240 = vmor %vm227, %vm239
      %v242 = vshrl.u32 %v237, 16
      %v244 = vrot.slane %v242, 7
      %v245 = vshll.u32 %v237, 16
      %v247 = vor.u32 %v244, %v245
      %v248 = vrot.slane %v244, 4
      %v250 = vshrl.u32 %v238, 16
      %v252 = vrot.slane %v250, 7
      %v253 = vshll.u32 %v238, 16
      %v255 = vor.u32 %v252, %v253
      %v256 = vsel %vm240, %v248, %v255
      %v257 = vrot.slane %v252, 4
      %vm261 = vcmask 1043456
      %vm262 = vmand %vm261, %vm232
      %v263 = vld [vmem:[#allocation2] sm:$0xf]
      %v264 = vsel %vm262, %v247, %v263
      %265 = vst [vmem:[#allocation2] sm:$0xf] %v264
      %266 = vst [vmem:[#allocation2 + $0x4] sm:$0xf] %v256
      %v267 = vld [vmem:[#allocation2 + $0x8] sm:$0x1]
      %v268 = vsel %vm228, %v257, %v267
      %269 = vst [vmem:[#allocation2 + $0x8] sm:$0x1] %v268
      %v270 = vld [vmem:[#allocation3] sm:$0x1]
      %v271 = vsel %vm228, 0, %v270
      %272 = vst [vmem:[#allocation3] sm:$0x1] %v271
      %v273 = vld [vmem:[#allocation3 + $0x8] sm:$0x1]
      %v274 = vsel %vm233, 0, %v273
      %275 = vst [vmem:[#allocation3 + $0x8] sm:$0x1] %v274
      %v276 = vld [vmem:[#allocation2] sm:$0xf]
      %v277 = vld [vmem:[#allocation2 + $0x4] sm:$0xf]
      %v278 = vld [vmem:[%s1] sm:$0xf]
      %v279 = vld [vmem:[%s1 + $0x4] sm:$0xf]
      %v280 = vld [vmem:[%s1 + $0x8] sm:$0xf]
      %v281 = vld [vmem:[%s1 + $0xc] sm:$0xf]
      %v282 = vld [vmem:[%s1 + $0x10] sm:$0xf]
      %v283 = vld [vmem:[%s1 + $0x14] sm:$0xf]
      %v284 = vld [vmem:[%s1 + $0x18] sm:$0xf]
      %v285 = vld [vmem:[%s1 + $0x1c] sm:$0xf]
      %v286 = vld [vmem:[%s1 + $0x20] sm:$0xf]
      %v287 = vld [vmem:[%s1 + $0x24] sm:$0xf]
      %v288 = vld [vmem:[%s1 + $0x28] sm:$0xf]
      %v289 = vld [vmem:[%s1 + $0x2c] sm:$0xf]
      %v290 = vld [vmem:[%s1 + $0x30] sm:$0xf]
      %v291 = vld [vmem:[%s1 + $0x34] sm:$0xf]
      %v292 = vld [vmem:[%s1 + $0x38] sm:$0xf]
      %v293 = vld [vmem:[%s1 + $0x3c] sm:$0xf]
      %v294 = vld [vmem:[#allocation2 + $0x8] sm:$0x1]
      %s295 = scalar_lea.vmem %s1, 64
      %v296 = vld [vmem:[%s295] sm:$0xf]
      %v297 = vld [vmem:[%s295 + $0x4] sm:$0xf]
      %v298 = vld [vmem:[%s295 + $0x8] sm:$0xf]
      %v299 = vld [vmem:[%s295 + $0xc] sm:$0xf]
      %v300 = vld [vmem:[%s295 + $0x10] sm:$0xf]
      %v301 = vld [vmem:[%s295 + $0x14] sm:$0xf]
      %v302 = vld [vmem:[%s295 + $0x18] sm:$0xf]
      %v303 = vld [vmem:[%s295 + $0x1c] sm:$0xf]
      %v304 = vld [vmem:[%s295 + $0x20] sm:$0xf]
      %v305 = vld [vmem:[%s295 + $0x24] sm:$0xf]
      %v306 = vld [vmem:[%s295 + $0x28] sm:$0xf]
      %v307 = vld [vmem:[%s295 + $0x2c] sm:$0xf]
      %v308 = vld [vmem:[%s295 + $0x30] sm:$0xf]
      %v309 = vld [vmem:[%s295 + $0x34] sm:$0xf]
      %v310 = vld [vmem:[%s295 + $0x38] sm:$0xf]
      %v311 = vld [vmem:[%s295 + $0x3c] sm:$0xf]
      %v315 = vunpack.c.l.b16 %v276
      %v316 = vunpack.c.l.b16 %v277
      %v317 = vunpack.c.l.b16 %v294
      %v318 = vpack.c.b16 %v316, %v315
      %v319 = vpack.c.b16 %v317, %v317
      %vm320 = vsmask.f32 7424
      %v322 = vshrl.u32 %v318, 16
      %v324 = vshll.u32 %v318, 16
      %v326 = vrot.slane %v324, 1
      %v327 = vor.u32 %v322, %v326
      %v329 = vshll.u32 %v319, 16
      %v331 = vrot.slane %v329, 1
      %v332 = vsel %vm320, %v327, %v331
      %v350 = vunpack.c.l.b16 %v296
      %v351 = vunpack.c.l.b16 %v297
      %v352 = vunpack.c.l.b16 %v298
      %v353 = vunpack.c.l.b16 %v299
      %v354 = vunpack.c.l.b16 %v300
      %v355 = vunpack.c.l.b16 %v301
      %v356 = vunpack.c.l.b16 %v302
      %v357 = vunpack.c.l.b16 %v303
      %v358 = vunpack.c.l.b16 %v304
      %v359 = vunpack.c.l.b16 %v305
      %v360 = vunpack.c.l.b16 %v306
      %v361 = vunpack.c.l.b16 %v307
      %v362 = vunpack.c.l.b16 %v308
      %v363 = vunpack.c.l.b16 %v309
      %v364 = vunpack.c.l.b16 %v310
      %v365 = vunpack.c.l.b16 %v311
      %v366 = vpack.c.b16 %v351, %v350
      %v367 = vpack.c.b16 %v353, %v352
      %v368 = vpack.c.b16 %v355, %v354
      %v369 = vpack.c.b16 %v357, %v356
      %v370 = vpack.c.b16 %v359, %v358
      %v371 = vpack.c.b16 %v361, %v360
      %v372 = vpack.c.b16 %v363, %v362
      %v373 = vpack.c.b16 %v365, %v364
      %382 = vmatpush.bf16.msra.mxu0 %v373
      %383 = vmatpush.bf16.msra.mxu0 %v372
      %384 = vmatpush.bf16.msra.mxu0 %v371
      %385 = vmatpush.bf16.msra.mxu0 %v370
      %386 = vmatpush.bf16.msra.mxu0 %v369
      %387 = vmatpush.bf16.msra.mxu0 %v368
      %388 = vmatpush.bf16.msra.mxu0 %v367
      %389 = vmatpush.bf16.msra.mxu0 %v366
      %390 = vmatmul.bf16.gmra.mxu0 %v332
      %v391 = vpop.f32.mrf.mxu0
      %v392 = vadd.f32 0.0, %v391
      %v393 = vpop.f32.mrf.mxu0
      %v394 = vadd.f32 0.0, %v393
      %395 = vdwg.mxu0
      %v413 = vunpack.c.l.b16 %v278
      %v414 = vunpack.c.l.b16 %v279
      %v415 = vunpack.c.l.b16 %v280
      %v416 = vunpack.c.l.b16 %v281
      %v417 = vunpack.c.l.b16 %v282
      %v418 = vunpack.c.l.b16 %v283
      %v419 = vunpack.c.l.b16 %v284
      %v420 = vunpack.c.l.b16 %v285
      %v421 = vunpack.c.l.b16 %v286
      %v422 = vunpack.c.l.b16 %v287
      %v423 = vunpack.c.l.b16 %v288
      %v424 = vunpack.c.l.b16 %v289
      %v425 = vunpack.c.l.b16 %v290
      %v426 = vunpack.c.l.b16 %v291
      %v427 = vunpack.c.l.b16 %v292
      %v428 = vunpack.c.l.b16 %v293
      %v429 = vpack.c.b16 %v414, %v413
      %v430 = vpack.c.b16 %v416, %v415
      %v431 = vpack.c.b16 %v418, %v417
      %v432 = vpack.c.b16 %v420, %v419
      %v433 = vpack.c.b16 %v422, %v421
      %v434 = vpack.c.b16 %v424, %v423
      %v435 = vpack.c.b16 %v426, %v425
      %v436 = vpack.c.b16 %v428, %v427
      %445 = vmatpush.bf16.msra.mxu0 %v436
      %446 = vmatpush.bf16.msra.mxu0 %v435
      %447 = vmatpush.bf16.msra.mxu0 %v434
      %448 = vmatpush.bf16.msra.mxu0 %v433
      %449 = vmatpush.bf16.msra.mxu0 %v432
      %450 = vmatpush.bf16.msra.mxu0 %v431
      %451 = vmatpush.bf16.msra.mxu0 %v430
      %452 = vmatpush.bf16.msra.mxu0 %v429
      %453 = vmatmul.bf16.gmra.mxu0 %v318
      %v454 = vpop.f32.mrf.mxu0
      %v455 = vadd.f32 %v392, %v454
      %v456 = vpop.f32.mrf.mxu0
      %v457 = vadd.f32 %v394, %v456
      %458 = vdwg.mxu0
      %v459 = vld [vmem:[#allocation2] sm:$0xe]
      %s460 = scalar_lea.vmem %s1, 128
      %v461 = vld [vmem:[%s460] sm:$0xf]
      %v462 = vld [vmem:[%s460 + $0x4] sm:$0xf]
      %v463 = vld [vmem:[%s460 + $0x8] sm:$0xf]
      %v464 = vld [vmem:[%s460 + $0xc] sm:$0xf]
      %v465 = vld [vmem:[%s460 + $0x10] sm:$0xf]
      %v466 = vld [vmem:[%s460 + $0x14] sm:$0xf]
      %v467 = vld [vmem:[%s460 + $0x18] sm:$0xf]
      %v468 = vld [vmem:[%s460 + $0x1c] sm:$0xf]
      %v469 = vld [vmem:[%s460 + $0x20] sm:$0xf]
      %v470 = vld [vmem:[%s460 + $0x24] sm:$0xf]
      %v471 = vld [vmem:[%s460 + $0x28] sm:$0xf]
      %v472 = vld [vmem:[%s460 + $0x2c] sm:$0xf]
      %v473 = vld [vmem:[%s460 + $0x30] sm:$0xf]
      %v474 = vld [vmem:[%s460 + $0x34] sm:$0xf]
      %v475 = vld [vmem:[%s460 + $0x38] sm:$0xf]
      %v476 = vld [vmem:[%s460 + $0x3c] sm:$0xf]
      %v478 = vunpack.c.l.b16 %v459
      %v479 = vpack.c.b16 %v316, %v478
      %vm480 = vcmask 1046528
      %v481 = vrot.slane %v479, 1
      %v482 = vrot.slane %v319, 1
      %v483 = vsel %vm480, %v481, %v482
      %v501 = vunpack.c.l.b16 %v461
      %v502 = vunpack.c.l.b16 %v462
      %v503 = vunpack.c.l.b16 %v463
      %v504 = vunpack.c.l.b16 %v464
      %v505 = vunpack.c.l.b16 %v465
      %v506 = vunpack.c.l.b16 %v466
      %v507 = vunpack.c.l.b16 %v467
      %v508 = vunpack.c.l.b16 %v468
      %v509 = vunpack.c.l.b16 %v469
      %v510 = vunpack.c.l.b16 %v470
      %v511 = vunpack.c.l.b16 %v471
      %v512 = vunpack.c.l.b16 %v472
      %v513 = vunpack.c.l.b16 %v473
      %v514 = vunpack.c.l.b16 %v474
      %v515 = vunpack.c.l.b16 %v475
      %v516 = vunpack.c.l.b16 %v476
      %v517 = vpack.c.b16 %v502, %v501
      %v518 = vpack.c.b16 %v504, %v503
      %v519 = vpack.c.b16 %v506, %v505
      %v520 = vpack.c.b16 %v508, %v507
      %v521 = vpack.c.b16 %v510, %v509
      %v522 = vpack.c.b16 %v512, %v511
      %v523 = vpack.c.b16 %v514, %v513
      %v524 = vpack.c.b16 %v516, %v515
      %533 = vmatpush.bf16.msra.mxu0 %v524
      %534 = vmatpush.bf16.msra.mxu0 %v523
      %535 = vmatpush.bf16.msra.mxu0 %v522
      %536 = vmatpush.bf16.msra.mxu0 %v521
      %537 = vmatpush.bf16.msra.mxu0 %v520
      %538 = vmatpush.bf16.msra.mxu0 %v519
      %539 = vmatpush.bf16.msra.mxu0 %v518
      %540 = vmatpush.bf16.msra.mxu0 %v517
      %541 = vmatmul.bf16.gmra.mxu0 %v483
      %v542 = vpop.f32.mrf.mxu0
      %v543 = vadd.f32 0.0, %v542
      %v544 = vpop.f32.mrf.mxu0
      %v545 = vadd.f32 0.0, %v544
      %546 = vdwg.mxu0
      %v547 = vadd.f32 %v455, %v543
      %v548 = vadd.f32 %v457, %v545
      %v549 = vld [vmem:[%s3] sm:$0x1]
      %v551 = vperm.slane %v549, 0
      %v553 = vadd.f32 %v547, %v551
      %v554 = vadd.f32 %v548, %v551
      %vm555 = vcmp.ge.f32.partialorder %v553, 0.0
      %vm556 = vcmp.ge.f32.partialorder %v554, 0.0
      %v557 = vmul.f32 %v553, 0.01
      %v558 = vmul.f32 %v554, 0.01
      %v559 = vsel %vm555, %v553, %v557
      %v560 = vsel %vm556, %v554, %v558
      %v561 = vpack.c.bf16 %v559, %v559
      %v562 = vpack.c.bf16 %v560, %v560
      %v564 = vshrl.u32 %v561, 16
      %v566 = vrot.slane %v564, 7
      %v567 = vshll.u32 %v561, 16
      %v569 = vor.u32 %v566, %v567
      %v570 = vrot.slane %v566, 4
      %v572 = vshrl.u32 %v562, 16
      %v574 = vrot.slane %v572, 7
      %v575 = vshll.u32 %v562, 16
      %v577 = vor.u32 %v574, %v575
      %v578 = vsel %vm240, %v570, %v577
      %v579 = vrot.slane %v574, 4
      %v583 = vld [vmem:[#allocation3] sm:$0xf]
      %v584 = vsel %vm262, %v569, %v583
      %585 = vst [vmem:[#allocation3] sm:$0xf] %v584
      %586 = vst [vmem:[#allocation3 + $0x4] sm:$0xf] %v578
      %v587 = vld [vmem:[#allocation3 + $0x8] sm:$0x1]
      %v588 = vsel %vm228, %v579, %v587
      %589 = vst [vmem:[#allocation3 + $0x8] sm:$0x1] %v588
      %v590 = vld [vmem:[#allocation3] sm:$0xf]
      %v591 = vld [vmem:[#allocation3 + $0x4] sm:$0xf]
      %v592 = vld [vmem:[%s2] sm:$0xf]
      %v593 = vld [vmem:[%s2 + $0x4] sm:$0xf]
      %v594 = vld [vmem:[%s2 + $0x8] sm:$0xf]
      %v595 = vld [vmem:[%s2 + $0xc] sm:$0xf]
      %v596 = vld [vmem:[%s2 + $0x10] sm:$0xf]
      %v597 = vld [vmem:[%s2 + $0x14] sm:$0xf]
      %v598 = vld [vmem:[%s2 + $0x18] sm:$0xf]
      %v599 = vld [vmem:[%s2 + $0x1c] sm:$0xf]
      %v600 = vld [vmem:[%s2 + $0x20] sm:$0xf]
      %v601 = vld [vmem:[%s2 + $0x24] sm:$0xf]
      %v602 = vld [vmem:[%s2 + $0x28] sm:$0xf]
      %v603 = vld [vmem:[%s2 + $0x2c] sm:$0xf]
      %v604 = vld [vmem:[%s2 + $0x30] sm:$0xf]
      %v605 = vld [vmem:[%s2 + $0x34] sm:$0xf]
      %v606 = vld [vmem:[%s2 + $0x38] sm:$0xf]
      %v607 = vld [vmem:[%s2 + $0x3c] sm:$0xf]
      %v608 = vld [vmem:[#allocation3 + $0x8] sm:$0x1]
      %s609 = scalar_lea.vmem %s2, 64
      %v610 = vld [vmem:[%s609] sm:$0xf]
      %v611 = vld [vmem:[%s609 + $0x4] sm:$0xf]
      %v612 = vld [vmem:[%s609 + $0x8] sm:$0xf]
      %v613 = vld [vmem:[%s609 + $0xc] sm:$0xf]
      %v614 = vld [vmem:[%s609 + $0x10] sm:$0xf]
      %v615 = vld [vmem:[%s609 + $0x14] sm:$0xf]
      %v616 = vld [vmem:[%s609 + $0x18] sm:$0xf]
      %v617 = vld [vmem:[%s609 + $0x1c] sm:$0xf]
      %v618 = vld [vmem:[%s609 + $0x20] sm:$0xf]
      %v619 = vld [vmem:[%s609 + $0x24] sm:$0xf]
      %v620 = vld [vmem:[%s609 + $0x28] sm:$0xf]
      %v621 = vld [vmem:[%s609 + $0x2c] sm:$0xf]
      %v622 = vld [vmem:[%s609 + $0x30] sm:$0xf]
      %v623 = vld [vmem:[%s609 + $0x34] sm:$0xf]
      %v624 = vld [vmem:[%s609 + $0x38] sm:$0xf]
      %v625 = vld [vmem:[%s609 + $0x3c] sm:$0xf]
      %v629 = vunpack.c.l.b16 %v590
      %v630 = vunpack.c.l.b16 %v591
      %v631 = vunpack.c.l.b16 %v608
      %v632 = vpack.c.b16 %v630, %v629
      %v633 = vpack.c.b16 %v631, %v631
      %v635 = vshrl.u32 %v632, 16
      %v637 = vshll.u32 %v632, 16
      %v639 = vrot.slane %v637, 1
      %v640 = vor.u32 %v635, %v639
      %v642 = vshll.u32 %v633, 16
      %v644 = vrot.slane %v642, 1
      %v645 = vsel %vm320, %v640, %v644
      %v663 = vunpack.c.l.b16 %v610
      %v664 = vunpack.c.l.b16 %v611
      %v665 = vunpack.c.l.b16 %v612
      %v666 = vunpack.c.l.b16 %v613
      %v667 = vunpack.c.l.b16 %v614
      %v668 = vunpack.c.l.b16 %v615
      %v669 = vunpack.c.l.b16 %v616
      %v670 = vunpack.c.l.b16 %v617
      %v671 = vunpack.c.l.b16 %v618
      %v672 = vunpack.c.l.b16 %v619
      %v673 = vunpack.c.l.b16 %v620
      %v674 = vunpack.c.l.b16 %v621
      %v675 = vunpack.c.l.b16 %v622
      %v676 = vunpack.c.l.b16 %v623
      %v677 = vunpack.c.l.b16 %v624
      %v678 = vunpack.c.l.b16 %v625
      %v679 = vpack.c.b16 %v664, %v663
      %v680 = vpack.c.b16 %v666, %v665
      %v681 = vpack.c.b16 %v668, %v667
      %v682 = vpack.c.b16 %v670, %v669
      %v683 = vpack.c.b16 %v672, %v671
      %v684 = vpack.c.b16 %v674, %v673
      %v685 = vpack.c.b16 %v676, %v675
      %v686 = vpack.c.b16 %v678, %v677
      %695 = vmatpush.bf16.msra.mxu0 %v686
      %696 = vmatpush.bf16.msra.mxu0 %v685
      %697 = vmatpush.bf16.msra.mxu0 %v684
      %698 = vmatpush.bf16.msra.mxu0 %v683
      %699 = vmatpush.bf16.msra.mxu0 %v682
      %700 = vmatpush.bf16.msra.mxu0 %v681
      %701 = vmatpush.bf16.msra.mxu0 %v680
      %702 = vmatpush.bf16.msra.mxu0 %v679
      %703 = vmatmul.bf16.gmra.mxu0 %v645
      %v704 = vpop.f32.mrf.mxu0
      %v705 = vadd.f32 0.0, %v704
      %v706 = vpop.f32.mrf.mxu0
      %v707 = vadd.f32 0.0, %v706
      %708 = vdwg.mxu0
      %v726 = vunpack.c.l.b16 %v592
      %v727 = vunpack.c.l.b16 %v593
      %v728 = vunpack.c.l.b16 %v594
      %v729 = vunpack.c.l.b16 %v595
      %v730 = vunpack.c.l.b16 %v596
      %v731 = vunpack.c.l.b16 %v597
      %v732 = vunpack.c.l.b16 %v598
      %v733 = vunpack.c.l.b16 %v599
      %v734 = vunpack.c.l.b16 %v600
      %v735 = vunpack.c.l.b16 %v601
      %v736 = vunpack.c.l.b16 %v602
      %v737 = vunpack.c.l.b16 %v603
      %v738 = vunpack.c.l.b16 %v604
      %v739 = vunpack.c.l.b16 %v605
      %v740 = vunpack.c.l.b16 %v606
      %v741 = vunpack.c.l.b16 %v607
      %v742 = vpack.c.b16 %v727, %v726
      %v743 = vpack.c.b16 %v729, %v728
      %v744 = vpack.c.b16 %v731, %v730
      %v745 = vpack.c.b16 %v733, %v732
      %v746 = vpack.c.b16 %v735, %v734
      %v747 = vpack.c.b16 %v737, %v736
      %v748 = vpack.c.b16 %v739, %v738
      %v749 = vpack.c.b16 %v741, %v740
      %758 = vmatpush.bf16.msra.mxu0 %v749
      %759 = vmatpush.bf16.msra.mxu0 %v748
      %760 = vmatpush.bf16.msra.mxu0 %v747
      %761 = vmatpush.bf16.msra.mxu0 %v746
      %762 = vmatpush.bf16.msra.mxu0 %v745
      %763 = vmatpush.bf16.msra.mxu0 %v744
      %764 = vmatpush.bf16.msra.mxu0 %v743
      %765 = vmatpush.bf16.msra.mxu0 %v742
      %766 = vmatmul.bf16.gmra.mxu0 %v632
      %v767 = vpop.f32.mrf.mxu0
      %v768 = vadd.f32 %v705, %v767
      %v769 = vpop.f32.mrf.mxu0
      %v770 = vadd.f32 %v707, %v769
      %771 = vdwg.mxu0
      %v772 = vld [vmem:[#allocation3] sm:$0xe]
      %s773 = scalar_lea.vmem %s2, 128
      %v774 = vld [vmem:[%s773] sm:$0xf]
      %v775 = vld [vmem:[%s773 + $0x4] sm:$0xf]
      %v776 = vld [vmem:[%s773 + $0x8] sm:$0xf]
      %v777 = vld [vmem:[%s773 + $0xc] sm:$0xf]
      %v778 = vld [vmem:[%s773 + $0x10] sm:$0xf]
      %v779 = vld [vmem:[%s773 + $0x14] sm:$0xf]
      %v780 = vld [vmem:[%s773 + $0x18] sm:$0xf]
      %v781 = vld [vmem:[%s773 + $0x1c] sm:$0xf]
      %v782 = vld [vmem:[%s773 + $0x20] sm:$0xf]
      %v783 = vld [vmem:[%s773 + $0x24] sm:$0xf]
      %v784 = vld [vmem:[%s773 + $0x28] sm:$0xf]
      %v785 = vld [vmem:[%s773 + $0x2c] sm:$0xf]
      %v786 = vld [vmem:[%s773 + $0x30] sm:$0xf]
      %v787 = vld [vmem:[%s773 + $0x34] sm:$0xf]
      %v788 = vld [vmem:[%s773 + $0x38] sm:$0xf]
      %v789 = vld [vmem:[%s773 + $0x3c] sm:$0xf]
      %v791 = vunpack.c.l.b16 %v772
      %v792 = vpack.c.b16 %v630, %v791
      %v793 = vrot.slane %v792, 1
      %v794 = vrot.slane %v633, 1
      %v795 = vsel %vm480, %v793, %v794
      %v813 = vunpack.c.l.b16 %v774
      %v814 = vunpack.c.l.b16 %v775
      %v815 = vunpack.c.l.b16 %v776
      %v816 = vunpack.c.l.b16 %v777
      %v817 = vunpack.c.l.b16 %v778
      %v818 = vunpack.c.l.b16 %v779
      %v819 = vunpack.c.l.b16 %v780
      %v820 = vunpack.c.l.b16 %v781
      %v821 = vunpack.c.l.b16 %v782
      %v822 = vunpack.c.l.b16 %v783
      %v823 = vunpack.c.l.b16 %v784
      %v824 = vunpack.c.l.b16 %v785
      %v825 = vunpack.c.l.b16 %v786
      %v826 = vunpack.c.l.b16 %v787
      %v827 = vunpack.c.l.b16 %v788
      %v828 = vunpack.c.l.b16 %v789
      %v829 = vpack.c.b16 %v814, %v813
      %v830 = vpack.c.b16 %v816, %v815
      %v831 = vpack.c.b16 %v818, %v817
      %v832 = vpack.c.b16 %v820, %v819
      %v833 = vpack.c.b16 %v822, %v821
      %v834 = vpack.c.b16 %v824, %v823
      %v835 = vpack.c.b16 %v826, %v825
      %v836 = vpack.c.b16 %v828, %v827
      %845 = vmatpush.bf16.msra.mxu0 %v836
      %846 = vmatpush.bf16.msra.mxu0 %v835
      %847 = vmatpush.bf16.msra.mxu0 %v834
      %848 = vmatpush.bf16.msra.mxu0 %v833
      %849 = vmatpush.bf16.msra.mxu0 %v832
      %850 = vmatpush.bf16.msra.mxu0 %v831
      %851 = vmatpush.bf16.msra.mxu0 %v830
      %852 = vmatpush.bf16.msra.mxu0 %v829
      %853 = vmatmul.bf16.gmra.mxu0 %v795
      %v854 = vpop.f32.mrf.mxu0
      %v855 = vadd.f32 0.0, %v854
      %v856 = vpop.f32.mrf.mxu0
      %v857 = vadd.f32 0.0, %v856
      %858 = vdwg.mxu0
      %v859 = vadd.f32 %v768, %v855
      %v860 = vadd.f32 %v770, %v857
      %v861 = vld [vmem:[%s4] sm:$0x1]
      %v863 = vperm.slane %v861, 0
      %v865 = vadd.f32 %v859, %v863
      %v866 = vadd.f32 %v860, %v863
      %vm867 = vcmp.ge.f32.partialorder %v865, 0.0
      %vm868 = vcmp.ge.f32.partialorder %v866, 0.0
      %v869 = vmul.f32 %v865, 0.01
      %v870 = vmul.f32 %v866, 0.01
      %v871 = vsel %vm867, %v865, %v869
      %v872 = vsel %vm868, %v866, %v870
      %873 = vst [vmem:[%s224] sm:$0xff] %v871
      %874 = vst [vmem:[%s224 + $0x8] sm:$0xff] %v872
      %p875 = scmp.lt.s32.totalorder %s16, 1
      %s876 = scalar_select %p875, %s16, 1
      %s877 = smul.addr %s876, 2
      %s878 = smul.addr %s877, 8
      %s879 = scalar_lea.vmem %s5, %s878
      // Predicated region
      $region41: #{cnn_layer_forward.1} parent=39 // pred_check
        %p880 = pneg %p144
      $region42: #{cnn_layer_forward.1} parent=39 // pred_check_branch
        %882 = sbr.rel (%p880) target = $region44
      $region43: #{cnn_layer_forward.1} parent=39 // pred_region
        _
      $region44: #{cnn_layer_forward.1} parent=39 // pred_fallthru
        _
    $region40: #{cnn_layer_forward.1} parent=5 // pred_fallthru
      _
    %p883 = scmp.le.s32.totalorder 2, %s11
    // Predicated region
    $region45: #{cnn_layer_forward.1} parent=5 // pred_check
      %p884 = pneg %p883
    $region46: #{cnn_layer_forward.1} parent=5 // pred_check_branch
      %886 = sbr.rel (%p884) target = $region48
    $region47: #{cnn_layer_forward.1} parent=5 // pred_region
      %s887 = ssub.s32 %s11, 2
      // Predicated region
      $region49: #{cnn_layer_forward.1} parent=47 // pred_check
        %p888 = pneg %p150
      $region50: #{cnn_layer_forward.1} parent=47 // pred_check_branch
        %890 = sbr.rel (%p888) target = $region52
      $region51: #{cnn_layer_forward.1} parent=47 // pred_region
        %p891 = scmp.lt.s32.totalorder %s17, 1
        %s892 = scalar_select %p891, %s17, 1
        %s893 = smul.addr %s892, 2
        %s894 = smul.addr %s893, 8
        %s895 = scalar_lea.vmem %s5, %s894
      $region52: #{cnn_layer_forward.1} parent=47 // pred_fallthru
        _
    $region48: #{cnn_layer_forward.1} parent=5 // pred_fallthru
      _
  $region6: #{cnn_layer_forward.1} parent=0 // loop_footer
    %s15 = sadd.s32 1, %s11
  $region7: #{cnn_layer_forward.1} parent=0 // loop_footer_branch
    %10 = sbr.rel target = $region3
  $region8: #{cnn_layer_forward.1} parent=0 // loop_exit
    _

</llo_original>
